<compile_context>
chip_gen: v5e
topology: v5e:2x2
jax: 0.10.0
libtpu: 0.0.40
codegen_flags: <defaults>
</compile_context>

<pallas_src>
import jax
import jax.numpy as jnp
from jax.experimental import pallas as pl
from jax.experimental.pallas import tpu as pltpu


_VMEM_BUDGET = 48 * 1024 * 1024   # safe on v7x (64 MiB physical) and v5e/v6e (128 MiB)


def _patch_embed_kernel(x_ref, w_ref, b_ref, o_ref):
    # x_ref: (1, ts, K)    bf16 im2col patch rows (streamed)
    # w_ref: (K, Npad)     bf16 flattened conv weight (VMEM-resident, same block every step)
    # b_ref: (1, Npad)     f32 bias (VMEM-resident)
    # o_ref: (1, Cout, ts) f32 output tile, channel-major => NCHW without any XLA transpose
    acc = jnp.dot(x_ref[0], w_ref[...], preferred_element_type=jnp.float32)  # (ts, Npad)
    acc = acc + b_ref[...]                                                   # f32 bias add
    cout = o_ref.shape[1]
    # XLU transpose (separate issue slot; cheap vs. an HBM round trip), drop the N padding.
    o_ref[0] = jnp.transpose(acc)[:cout].astype(o_ref.dtype)


def _pick_s_tile(S, K, cout, n_pad):
    """Budget-aware tile along the patch axis. Returns (ts, S_pad)."""
    usable = int(_VMEM_BUDGET * 0.7)
    resident = 4 * K * n_pad                 # double-buffered bf16 weight
    per_row = 4 * K + 8 * cout               # double-buffered bf16 x row + f32 out column
    cap = max((usable - resident) // max(per_row, 1), 0)
    if S <= cap or cap < 128:
        # One tile spans the whole patch axis (block == full dim: always a legal shape).
        # TODO(synk): if K ever makes a whole-S tile exceed VMEM, add a K grid axis
        # with an f32 VMEM accumulator instead of keeping K whole.
        return S, S
    ts = min(512, (cap // 128) * 128)        # multiple of 128 -> lane-dense, unmasked stores
    for cand in range(ts, 127, -128):        # prefer an exact divisor of S (no padding)
        if S % cand == 0:
            return cand, S
    return ts, ((S + ts - 1) // ts) * ts


def channel_embeddings_pallas(x_nchw, weight, bias, patch_size):
    """Channel_Embeddings.forward: Conv2d(C->C, kernel=P, stride=P) + eval dropout.

    x_nchw: (B, C, H, W) f32;  weight: (Cout, Cin, P, P) f32;  bias: (Cout,) f32
    returns (B, Cout, H//P, W//P) f32  (same NCHW layout the PyTorch forward returns)
    """
    if x_nchw is None:                       # mirrors `if x is None: return None`
        return None

    B, C, H, W = x_nchw.shape
    Cout, Cin, P, P2 = weight.shape
    assert Cin == C and P == P2 == patch_size
    Hp, Wp = H // P, W // P
    # PyTorch Conv2d with stride == kernel silently drops the spatial remainder.
    if H != Hp * P or W != Wp * P:
        x_nchw = x_nchw[:, :, :Hp * P, :Wp * P]

    S = Hp * Wp
    K = C * P * P
    n_pad = ((Cout + 127) // 128) * 128

    # im2col glue: one fused XLA convert+transpose pass over the activations.
    # TODO(synk): fully fusing this into the kernel (strided DMA / in-kernel gather
    # over the P*P pixel positions straight from NCHW) would drop one more
    # activation pass; kept in the wrapper for robust lowering.
    xb = x_nchw.astype(jnp.bfloat16)
    patches = xb.reshape(B, C, Hp, P, Wp, P)
    patches = jnp.transpose(patches, (0, 2, 4, 1, 3, 5))      # (B, Hp, Wp, C, P, P)
    patches = patches.reshape(B, S, K)                        # (B, S, K) bf16

    ts, s_pad = _pick_s_tile(S, K, Cout, n_pad)
    if s_pad != S:
        patches = jnp.pad(patches, ((0, 0), (0, s_pad - S), (0, 0)))

    # Parameters only (cheap, one-time): weight (Cout, K) -> (K, Npad) bf16, bias f32.
    w_mat = weight.reshape(Cout, K).T.astype(jnp.bfloat16)
    b_mat = bias.reshape(1, Cout).astype(jnp.float32)
    if n_pad != Cout:
        w_mat = jnp.pad(w_mat, ((0, 0), (0, n_pad - Cout)))
        b_mat = jnp.pad(b_mat, ((0, 0), (0, n_pad - Cout)))

    grid = (B, s_pad // ts)

    out = pl.pallas_call(
        _patch_embed_kernel,
        out_shape=jax.ShapeDtypeStruct((B, Cout, s_pad), jnp.float32),
        grid=grid,
        in_specs=[
            pl.BlockSpec((1, ts, K), lambda b, i: (b, i, 0)),   # streamed patch rows
            pl.BlockSpec((K, n_pad), lambda b, i: (0, 0)),      # weight: loaded once, resident
            pl.BlockSpec((1, n_pad), lambda b, i: (0, 0)),      # bias:   loaded once, resident
        ],
        out_specs=pl.BlockSpec((1, Cout, ts), lambda b, i: (b, 0, i)),
        compiler_params=pltpu.CompilerParams(
            dimension_semantics=("parallel", "parallel"),
            vmem_limit_bytes=_VMEM_BUDGET,
        ),
    )(patches, w_mat, b_mat)

    if s_pad != S:                            # only in the awkward-shape fallback path
        out = out[:, :, :S]

    # TODO(synk): dropout is identity in eval mode; a training path would use
    # pltpu.prng_seed / pltpu.prng_random_bits + masking inside the kernel.

    # Free reshape (no data movement): (B, Cout, Hp*Wp) -> (B, Cout, Hp, Wp).
    return out.reshape(B, Cout, Hp, Wp)


def _reference(x_nchw, weight, bias, patch_size):
    # Pure-JAX reference conv (stride == kernel size) for a sanity check.
    out = jax.lax.conv_general_dilated(
        x_nchw, weight,
        window_strides=(patch_size, patch_size),
        padding="VALID",
        dimension_numbers=("NCHW", "OIHW", "NCHW"),
    )
    return out + bias.reshape(1, -1, 1, 1)


if __name__ == "__main__":
    key = jax.random.PRNGKey(0)
    B, C, H, W = 2, 4, 16, 16
    P = 4  # patchsize

    kx, kw, kb = jax.random.split(key, 3)
    x = jax.random.normal(kx, (B, C, H, W), dtype=jnp.float32)

    # Deterministic parameter init mimicking Conv2d default (uniform in +-bound).
    fan_in = C * P * P
    bound = 1.0 / (fan_in ** 0.5)
    weight = jax.random.uniform(kw, (C, C, P, P), minval=-bound, maxval=bound,
                                dtype=jnp.float32)
    bias = jax.random.uniform(kb, (C,), minval=-bound, maxval=bound,
                              dtype=jnp.float32)

    out = channel_embeddings_pallas(x, weight, bias, P)
    out = jax.block_until_ready(out)

    ref = _reference(x, weight, bias, P)
    assert out.shape == (B, C, H // P, W // P), out.shape
    # bf16 inputs into the MXU -> looser tolerance than pure-f32.
    err = float(jnp.max(jnp.abs(out - ref)))
    assert jnp.allclose(out, ref, atol=3e-2, rtol=3e-2), err

    print("KERNEL_OK")
</pallas_src>

<mosaic_0001>
module attributes {stable_mosaic.version = 11 : i64} {
  func.func @_patch_embed_kernel(%arg0: i32, %arg1: i32, %arg2: memref<1x16x64xbf16, #tpu.memory_space<vmem>>, %arg3: memref<64x128xbf16, #tpu.memory_space<vmem>>, %arg4: memref<1x128xf32, #tpu.memory_space<vmem>>, %arg5: memref<1x4x16xf32, #tpu.memory_space<vmem>>) attributes {dimension_semantics = [#tpu.dimension_semantics<parallel>, #tpu.dimension_semantics<parallel>], iteration_bounds = array<i64: 2, 1>, scalar_prefetch = 0 : i64, scratch_operands = 0 : i64, tpu.core_type = #tpu.core_type<tc>, window_params = [{transform_indices = @transform_0, window_bounds = array<i64: 1, 16, 64>}, {pipeline_mode = #tpu.pipeline_mode<synchronous>, transform_indices = @transform_1, window_bounds = array<i64: 64, 128>}, {pipeline_mode = #tpu.pipeline_mode<synchronous>, transform_indices = @transform_2, window_bounds = array<i64: 1, 128>}, {transform_indices = @transform_3, window_bounds = array<i64: 1, 4, 16>}]} {
    %c0 = arith.constant 0 : index
    %c0_0 = arith.constant 0 : index
    %c0_1 = arith.constant 0 : index
    %0 = vector.load %arg2[%c0, %c0_0, %c0_1] : memref<1x16x64xbf16, #tpu.memory_space<vmem>>, vector<1x16x64xbf16>
    %1 = vector.shape_cast %0 : vector<1x16x64xbf16> to vector<16x64xbf16>
    %c0_2 = arith.constant 0 : index
    %c0_3 = arith.constant 0 : index
    %2 = vector.load %arg3[%c0_2, %c0_3] : memref<64x128xbf16, #tpu.memory_space<vmem>>, vector<64x128xbf16>
    %cst = arith.constant dense<0.000000e+00> : vector<16x128xf32>
    %3 = tpu.matmul %1, %2, %cst {dimension_numbers = #tpu.dot_dimension_numbers<[1], [0], [0], [1], [0, 0, 1, 1], [], []>} : vector<16x64xbf16>, vector<64x128xbf16>, vector<16x128xf32> -> vector<16x128xf32>
    %c0_4 = arith.constant 0 : index
    %c0_5 = arith.constant 0 : index
    %4 = vector.load %arg4[%c0_4, %c0_5] : memref<1x128xf32, #tpu.memory_space<vmem>>, vector<1x128xf32>
    %5 = vector.broadcast %4 : vector<1x128xf32> to vector<16x128xf32>
    %6 = arith.addf %3, %5 : vector<16x128xf32>
    %7 = tpu.transpose %6, [1, 0] : vector<16x128xf32> -> vector<128x16xf32>
    %8 = vector.extract_strided_slice %7 {offsets = [0, 0], sizes = [4, 16], strides = [1, 1]} : vector<128x16xf32> to vector<4x16xf32>
    %c0_6 = arith.constant 0 : index
    %c0_7 = arith.constant 0 : index
    %c0_8 = arith.constant 0 : index
    %9 = vector.load %arg5[%c0_6, %c0_7, %c0_8] : memref<1x4x16xf32, #tpu.memory_space<vmem>>, vector<1x4x16xf32>
    %10 = vector.shape_cast %9 : vector<1x4x16xf32> to vector<4x16xf32>
    %11 = vector.shape_cast %8 : vector<4x16xf32> to vector<1x4x16xf32>
    tpu.vector_store %arg5[%c0_6, %c0_7, %c0_8], %11 {strides = array<i32>} : memref<1x4x16xf32, #tpu.memory_space<vmem>>, vector<1x4x16xf32>,
    return
  }
  func.func @transform_0(%arg0: i32, %arg1: i32) -> (i32, i32, i32) {
    %c0_i32 = arith.constant 0 : i32
    %c0_i32_0 = arith.constant 0 : i32
    return %arg0, %arg1, %c0_i32 : i32, i32, i32
  }
  func.func @transform_1(%arg0: i32, %arg1: i32) -> (i32, i32) {
    %c0_i32 = arith.constant 0 : i32
    %c0_i32_0 = arith.constant 0 : i32
    %c0_i32_1 = arith.constant 0 : i32
    return %c0_i32, %c0_i32_0 : i32, i32
  }
  func.func @transform_2(%arg0: i32, %arg1: i32) -> (i32, i32) {
    %c0_i32 = arith.constant 0 : i32
    %c0_i32_0 = arith.constant 0 : i32
    %c0_i32_1 = arith.constant 0 : i32
    return %c0_i32, %c0_i32_0 : i32, i32
  }
  func.func @transform_3(%arg0: i32, %arg1: i32) -> (i32, i32, i32) {
    %c0_i32 = arith.constant 0 : i32
    %c0_i32_0 = arith.constant 0 : i32
    return %arg0, %c0_i32, %arg1 : i32, i32, i32
  }
}

</mosaic_0001>

<llo_original>
// kernel: tpu_custom_call.1
$region0: #{tpu_custom_call.1}
  #allocation0 [shape = 'u32[]', space=smem, size = 0x4, offset = 0x4, fixed_abs, tag = 'smem constant byte address 0x4 - core index']
  #allocation1 [shape = 'u32[72,128]{1,0:T(1,128)}', space=vmem, size = 0x9000, scoped, tag = 'internal scratch']
  %s0 = inlined_call_operand.hbm [shape: bf16[2,16,64], index: 0, kind: input, shape index: {}]
  %s1 = inlined_call_operand.hbm [shape: bf16[64,128], index: 1, kind: input, shape index: {}]
  %s2 = inlined_call_operand.vmem [shape: f32[1,128], index: 2, kind: input, shape index: {}]
  %s3 = inlined_call_operand.hbm [shape: f32[2,4,16], index: 3, kind: output, shape index: {}]
  %s4 = sld [smem:[#allocation0]]
  $region53: #{tpu_custom_call.1} parent=0
    _
  %s6 = ssub.s32 1, %s4
  %s7 = scalar_select 0, %s6, %s4
  $region1: #{tpu_custom_call.1} parent=0
    #allocation2 [shape = 'u8[8192]{0}', space=vmem, size = 0x2000, scoped, tag = 'input window, operand 0']
    #allocation3 [shape = 's32[2]{0}', space=sflag, size = 0x8, scoped, tag = 'scoped memory for tpu_custom_call.1']
    #allocation4 [shape = 's32[2]{0}', space=sflag, size = 0x8, scoped, tag = 'scoped memory for tpu_custom_call.1']
    #allocation5 [shape = 'u8[16384]{0}', space=vmem, size = 0x4000, scoped, tag = 'input window, operand 1, single buffered']
    #allocation6 [shape = 's32[1]{0}', space=sflag, size = 0x4, scoped, tag = 'scoped memory for tpu_custom_call.1']
    #allocation7 [shape = 'u8[4096]{0}', space=vmem, size = 0x1000, scoped, tag = 'output window, operand 0']
    %8 = vsyncpa [#allocation3], 0
    %s9 = scalar_lea.sflag [#allocation3], 1
    %10 = vsyncpa %s9, 0
    %11 = vsyncpa [#allocation6], 0
    %12 = vsyncpa [#allocation4], 0
    %s13 = scalar_lea.sflag [#allocation4], 1
    %14 = vsyncpa %s13, 0
    loop: start=0, step=1, limit=4
    $region2: #{tpu_custom_call.1} parent=1 // loop_pre_header
      _
    $region3: #{tpu_custom_call.1} parent=1 // loop_header
      %s16 = sphi 0, %s20
      %p17 = scmp.ge.s32.totalorder %s16, 4
      %s23 = sphi 0, %s35
      %s24 = sphi 0, %s31
      %s25 = sphi 0, %s23
      %s26 = sphi 0, %s24
      %s27 = sphi 0, %s25
      %s28 = sphi 0, %s26
      %s40 = sphi 0, %s42
      %s43 = sphi 0, %s40
      %s44 = sphi 0, %s43
      %s60 = sphi 0, %s44
      %s64 = sphi 0, %s64
      %s66 = sphi 0, %s64
      %s67 = sphi 0, %s66
      %s81 = sphi 0, %s67
      %s85 = sphi 0, %s85
      %s87 = sphi 0, %s85
      %s88 = sphi 0, %s87
      %s102 = sphi 0, %s88
      %s110 = sphi 0, %s112
      %s113 = sphi 0, %s110
      %s114 = sphi 0, %s113
      %s130 = sphi 0, %s114
    $region4: #{tpu_custom_call.1} parent=1 // loop_header_branch
      %19 = sbr.rel (%p17) target = $region8
    $region5: #{tpu_custom_call.1} parent=1 // loop_body
      %s21 = ssub.s32 %s16, 1
      %s22 = ssub.s32 %s16, 2
      %s29 = sadd.s32 1, %s24
      %p30 = scmp.ge.s32.totalorder %s29, 1
      %s31 = scalar_select %p30, 0, %s29
      %s32 = sadd.s32 1, %s23
      %s33 = scalar_select %p30, %s32, %s23
      %p34 = scmp.ge.s32.totalorder %s33, 2
      %s35 = scalar_select %p34, 0, %s33
      %s36 = ssub.s32 %s23, %s35
      %s37 = ssub.s32 %s24, %s31
      %s38 = sor.u32 %s36, %s37
      %p39 = scmp.eq.s32.totalorder %s38, 0
      %s41 = sadd.s32 %s40, 1
      %s42 = scalar_select %p39, %s40, %s41
      %p45 = pneg %p39
      %p46 = scmp.eq.s32.totalorder %s16, 1
      %p47 = por %p45, %p46
      %p48 = scmp.ne.s32.totalorder %s40, %s43
      %p49 = scmp.eq.s32.totalorder %s16, 0
      %p50 = por %p48, %p49
      %p51 = scmp.ne.s32.totalorder %s40, %s43
      %p52 = scmp.eq.s32.totalorder %s21, 1
      %p53 = por %p51, %p52
      %p54 = scmp.ne.s32.totalorder %s43, %s44
      %p55 = scmp.eq.s32.totalorder %s21, 0
      %p56 = por %p54, %p55
      %p57 = scmp.ne.s32.totalorder %s43, %s44
      %p58 = scmp.eq.s32.totalorder %s22, 1
      %p59 = por %p57, %p58
      %p61 = scmp.ne.s32.totalorder %s44, %s60
      %p62 = scmp.eq.s32.totalorder %s22, 0
      %p63 = por %p61, %p62
      %s65 = sadd.s32 %s64, 1
      %p68 = scmp.eq.s32.totalorder %s16, 1
      %p69 = scmp.ne.s32.totalorder %s64, %s66
      %p70 = scmp.eq.s32.totalorder %s16, 0
      %p71 = por %p69, %p70
      %p72 = scmp.ne.s32.totalorder %s64, %s66
      %p73 = scmp.eq.s32.totalorder %s21, 1
      %p74 = por %p72, %p73
      %p75 = scmp.ne.s32.totalorder %s66, %s67
      %p76 = scmp.eq.s32.totalorder %s21, 0
      %p77 = por %p75, %p76
      %p78 = scmp.ne.s32.totalorder %s66, %s67
      %p79 = scmp.eq.s32.totalorder %s22, 1
      %p80 = por %p78, %p79
      %p82 = scmp.ne.s32.totalorder %s67, %s81
      %p83 = scmp.eq.s32.totalorder %s22, 0
      %p84 = por %p82, %p83
      %s86 = sadd.s32 %s85, 1
      %p89 = scmp.eq.s32.totalorder %s16, 1
      %p90 = scmp.ne.s32.totalorder %s85, %s87
      %p91 = scmp.eq.s32.totalorder %s16, 0
      %p92 = por %p90, %p91
      %p93 = scmp.ne.s32.totalorder %s85, %s87
      %p94 = scmp.eq.s32.totalorder %s21, 1
      %p95 = por %p93, %p94
      %p96 = scmp.ne.s32.totalorder %s87, %s88
      %p97 = scmp.eq.s32.totalorder %s21, 0
      %p98 = por %p96, %p97
      %p99 = scmp.ne.s32.totalorder %s87, %s88
      %p100 = scmp.eq.s32.totalorder %s22, 1
      %p101 = por %p99, %p100
      %p103 = scmp.ne.s32.totalorder %s88, %s102
      %p104 = scmp.eq.s32.totalorder %s22, 0
      %p105 = por %p103, %p104
      %s106 = ssub.s32 %s23, %s35
      %s107 = ssub.s32 %s24, %s31
      %s108 = sor.u32 %s106, %s107
      %p109 = scmp.eq.s32.totalorder %s108, 0
      %s111 = sadd.s32 %s110, 1
      %s112 = scalar_select %p109, %s110, %s111
      %p115 = pneg %p109
      %p116 = scmp.eq.s32.totalorder %s16, 1
      %p117 = por %p115, %p116
      %p118 = scmp.ne.s32.totalorder %s110, %s113
      %p119 = scmp.eq.s32.totalorder %s16, 0
      %p120 = por %p118, %p119
      %p121 = scmp.ne.s32.totalorder %s110, %s113
      %p122 = scmp.eq.s32.totalorder %s21, 1
      %p123 = por %p121, %p122
      %p124 = scmp.ne.s32.totalorder %s113, %s114
      %p125 = scmp.eq.s32.totalorder %s21, 0
      %p126 = por %p124, %p125
      %p127 = scmp.ne.s32.totalorder %s113, %s114
      %p128 = scmp.eq.s32.totalorder %s22, 1
      %p129 = por %p127, %p128
      %p131 = scmp.ne.s32.totalorder %s114, %s130
      %p132 = scmp.eq.s32.totalorder %s22, 0
      %p133 = por %p131, %p132
      %p134 = scmp.le.s32.totalorder 1, %s16
      %p135 = scmp.lt.s32.totalorder %s16, 3
      %p136 = pnand %p134, %p135
      %p137 = pneg %p136
      // Predicated region
      $region9: #{tpu_custom_call.1} parent=5 // pred_check
        _
      $region10: #{tpu_custom_call.1} parent=5 // pred_check_branch
        %139 = sbr.rel (%p136) target = $region12
      $region11: #{tpu_custom_call.1} parent=5 // pred_region
        %s140 = ssub.s32 %s16, 1
        // Predicated region
        $region13: #{tpu_custom_call.1} parent=11 // pred_check
          %p141 = pneg %p77
        $region14: #{tpu_custom_call.1} parent=11 // pred_check_branch
          %143 = sbr.rel (%p141) target = $region16
        $region15: #{tpu_custom_call.1} parent=11 // pred_region
          %145 = vsyncadd [#allocation6], 0
          %s146 = sshll.u32 %s1, 4
          %s147 = int_to_ptr.hbm [resolvable:$true] %s146
          %s148 = sshll.u32 [#allocation5], 4
          %s149 = int_to_ptr.vmem [resolvable:$true] %s148
          %154 = dma.hbm_to_vmem [thread:$0]  %s147, 512, %s149, [#allocation6], 64, 64, 4
        $region16: #{tpu_custom_call.1} parent=11 // pred_fallthru
          _
        // Predicated region
        $region17: #{tpu_custom_call.1} parent=11 // pred_check
          %p155 = pneg %p98
        $region18: #{tpu_custom_call.1} parent=11 // pred_check_branch
          %157 = sbr.rel (%p155) target = $region20
        $region19: #{tpu_custom_call.1} parent=11 // pred_region
          _
        $region20: #{tpu_custom_call.1} parent=11 // pred_fallthru
          _
      $region12: #{tpu_custom_call.1} parent=5 // pred_fallthru
        _
      %p158 = scmp.lt.s32.totalorder %s16, 2
      // Predicated region
      $region21: #{tpu_custom_call.1} parent=5 // pred_check
        %p159 = pneg %p158
      $region22: #{tpu_custom_call.1} parent=5 // pred_check_branch
        %161 = sbr.rel (%p159) target = $region24
      $region23: #{tpu_custom_call.1} parent=5 // pred_region
        // Predicated region
        $region25: #{tpu_custom_call.1} parent=23 // pred_check
          %p162 = pneg %p50
        $region26: #{tpu_custom_call.1} parent=23 // pred_check_branch
          %164 = sbr.rel (%p162) target = $region28
        $region27: #{tpu_custom_call.1} parent=23 // pred_region
          %s165 = sand.u32 %s40, 1
          %s166 = scalar_lea.sflag [#allocation3], %s165
          %s167 = sand.u32 %s40, 1
          %s168 = smul.addr %s167, 8
          %s169 = scalar_lea.vmem [#allocation2], %s168
          %s170 = smul.u32 2, %s24
          %172 = vsyncadd %s166, 0
          %s173 = smul.addr %s23, 2
          %s174 = sadd.s32 %s170, %s173
          %s175 = smul.addr %s174, 4
          %s176 = scalar_lea.hbm %s0, %s175
          %s177 = sshll.u32 %s176, 4
          %s178 = int_to_ptr.hbm [resolvable:$true] %s177
          %s179 = sshll.u32 %s169, 4
          %s180 = int_to_ptr.vmem [resolvable:$true] %s179
          %185 = dma.hbm_to_vmem [thread:$0]  %s178, 128, %s180, %s166, 64, 64, 4
        $region28: #{tpu_custom_call.1} parent=23 // pred_fallthru
          _
      $region24: #{tpu_custom_call.1} parent=5 // pred_fallthru
        _
      %p186 = scmp.le.s32.totalorder 1, %s16
      %p187 = scmp.lt.s32.totalorder %s16, 3
      %p188 = pnand %p186, %p187
      %p189 = pneg %p188
      // Predicated region
      $region29: #{tpu_custom_call.1} parent=5 // pred_check
        _
      $region30: #{tpu_custom_call.1} parent=5 // pred_check_branch
        %191 = sbr.rel (%p188) target = $region32
      $region31: #{tpu_custom_call.1} parent=5 // pred_region
        %s192 = ssub.s32 %s16, 1
        %s193 = sand.u32 %s43, 1
        %s194 = scalar_lea.sflag [#allocation3], %s193
        %s195 = sand.u32 %s43, 1
        %s196 = smul.addr %s195, 8
        %s197 = scalar_lea.vmem [#allocation2], %s196
        // Predicated region
        $region33: #{tpu_custom_call.1} parent=31 // pred_check
          %p198 = pneg %p56
        $region34: #{tpu_custom_call.1} parent=31 // pred_check_branch
          %200 = sbr.rel (%p198) target = $region36
        $region35: #{tpu_custom_call.1} parent=31 // pred_region
          %202 = dma.done %s194, 128
        $region36: #{tpu_custom_call.1} parent=31 // pred_fallthru
          _
        // Predicated region
        $region37: #{tpu_custom_call.1} parent=31 // pred_check
          %p203 = pneg %p77
        $region38: #{tpu_custom_call.1} parent=31 // pred_check_branch
          %205 = sbr.rel (%p203) target = $region40
        $region39: #{tpu_custom_call.1} parent=31 // pred_region
          %207 = dma.done [#allocation6], 512
        $region40: #{tpu_custom_call.1} parent=31 // pred_fallthru
          _
        %s208 = sand.u32 %s43, 1
        %s209 = scalar_lea.sflag [#allocation3], %s208
        %s210 = sand.u32 %s43, 1
        %s211 = smul.addr %s210, 8
        %s212 = scalar_lea.vmem [#allocation2], %s211
        %p213 = pneg %p56
        %p214 = pneg %p53
        %p215 = pneg %p77
        %p216 = pneg %p74
        %p217 = pneg %p98
        %p218 = pneg %p95
        %p219 = pneg %p126
        %p220 = pneg %p123
        %s221 = sand.u32 %s113, 1
        %s222 = scalar_lea.sflag [#allocation4], %s221
        %s223 = sand.u32 %s113, 1
        %s224 = smul.addr %s223, 4
        %s225 = scalar_lea.vmem [#allocation7], %s224
        %s226 = smul.u32 2, %s26
        %v228 = vld [vmem:[%s197] sm:$0xf]
        %v229 = vld [vmem:[%s197 + $0x4] sm:$0xf]
        %v230 = vld [vmem:[#allocation5] sm:$0xf]
        %v231 = vld [vmem:[#allocation5 + $0x4] sm:$0xf]
        %v232 = vld [vmem:[#allocation5 + $0x8] sm:$0xf]
        %v233 = vld [vmem:[#allocation5 + $0xc] sm:$0xf]
        %v234 = vld [vmem:[#allocation5 + $0x10] sm:$0xf]
        %v235 = vld [vmem:[#allocation5 + $0x14] sm:$0xf]
        %v236 = vld [vmem:[#allocation5 + $0x18] sm:$0xf]
        %v237 = vld [vmem:[#allocation5 + $0x1c] sm:$0xf]
        %v238 = vld [vmem:[%s2] sm:$0x1]
        %v240 = vperm.slane %v238, 0
        %v244 = vunpack.c.l.b16 %v228
        %v245 = vunpack.c.l.b16 %v229
        %v246 = vpack.c.b16 %v245, %v244
        %v255 = vunpack.c.l.b16 %v230
        %v256 = vunpack.c.l.b16 %v231
        %v257 = vunpack.c.l.b16 %v232
        %v258 = vunpack.c.l.b16 %v233
        %v259 = vunpack.c.l.b16 %v234
        %v260 = vunpack.c.l.b16 %v235
        %v261 = vunpack.c.l.b16 %v236
        %v262 = vunpack.c.l.b16 %v237
        %v263 = vpack.c.b16 %v256, %v255
        %v264 = vpack.c.b16 %v258, %v257
        %v265 = vpack.c.b16 %v260, %v259
        %v266 = vpack.c.b16 %v262, %v261
        %vm271 = vcmask 523264
        %v273 = vsel %vm271, %v246, 0
        %275 = vmatpush.bf16.msra.mxu0 0
        %276 = vmatpush.bf16.msra.mxu0 0
        %277 = vmatpush.bf16.msra.mxu0 0
        %278 = vmatpush.bf16.msra.mxu0 0
        %279 = vmatpush.bf16.msra.mxu0 %v266
        %280 = vmatpush.bf16.msra.mxu0 %v265
        %281 = vmatpush.bf16.msra.mxu0 %v264
        %282 = vmatpush.bf16.msra.mxu0 %v263
        %283 = vmatmul.bf16.gmra.mxu0 %v273
        %v284 = vpop.f32.mrf.mxu0
        %v285 = vadd.f32 %v240, %v284
        %v286 = vpop.f32.mrf.mxu0
        %v287 = vadd.f32 %v240, %v286
        %288 = vdwg.mxu0
        %289 = vxpose.xlu0.b32.start [1/16] %v285, 128
        %290 = vxpose.xlu0.b32.cont [2/16] %v287, 128
        %291 = vxpose.xlu0.b32.cont [3/16] 0.0, 128
        %292 = vxpose.xlu0.b32.cont [4/16] 0.0, 128
        %293 = vxpose.xlu0.b32.cont [5/16] 0.0, 128
        %294 = vxpose.xlu0.b32.cont [6/16] 0.0, 128
        %295 = vxpose.xlu0.b32.cont [7/16] 0.0, 128
        %296 = vxpose.xlu0.b32.cont [8/16] 0.0, 128
        %297 = vxpose.xlu0.b32.cont [9/16] 0.0, 128
        %298 = vxpose.xlu0.b32.cont [10/16] 0.0, 128
        %299 = vxpose.xlu0.b32.cont [11/16] 0.0, 128
        %300 = vxpose.xlu0.b32.cont [12/16] 0.0, 128
        %301 = vxpose.xlu0.b32.cont [13/16] 0.0, 128
        %302 = vxpose.xlu0.b32.cont [14/16] 0.0, 128
        %303 = vxpose.xlu0.b32.cont [15/16] 0.0, 128
        %304 = vxpose.xlu0.b32.end [16/16] 0.0, 128
        %v305 = vpop.trf.xlu0
        %v306 = vpop.trf.xlu0
        %v307 = vpop.trf.xlu0
        %v308 = vpop.trf.xlu0
        %v309 = vpop.trf.xlu0
        %v310 = vpop.trf.xlu0
        %v311 = vpop.trf.xlu0
        %v312 = vpop.trf.xlu0
        %v313 = vpop.trf.xlu0
        %v314 = vpop.trf.xlu0
        %v315 = vpop.trf.xlu0
        %v316 = vpop.trf.xlu0
        %v317 = vpop.trf.xlu0
        %v318 = vpop.trf.xlu0
        %v319 = vpop.trf.xlu0
        %v320 = vpop.trf.xlu0
        %vm321 = vcmask 125952
        %322 = vst.msk [vmem:[%s225] sm:$0xf] %vm321, %v305
        %s323 = sand.u32 %s113, 1
        %s324 = scalar_lea.sflag [#allocation4], %s323
        %s325 = sand.u32 %s113, 1
        %s326 = smul.addr %s325, 4
        %s327 = scalar_lea.vmem [#allocation7], %s326
        // Predicated region
        $region41: #{tpu_custom_call.1} parent=31 // pred_check
          %p328 = pneg %p123
        $region42: #{tpu_custom_call.1} parent=31 // pred_check_branch
          %330 = sbr.rel (%p328) target = $region44
        $region43: #{tpu_custom_call.1} parent=31 // pred_region
          %332 = vsyncadd %s324, 0
          %s333 = sadd.s32 %s26, %s25
          %s334 = smul.addr %s333, 4
          %s335 = scalar_lea.hbm %s3, %s334
          %s337 = sshll.u32 %s327, 4
          %s338 = int_to_ptr.vmem [resolvable:$true] %s337
          %s339 = sshll.u32 %s335, 4
          %s340 = int_to_ptr.hbm [resolvable:$true] %s339
          %342 = dma.vmem_to_hbm [thread:$0]  %s338, 64, %s340, %s324
        $region44: #{tpu_custom_call.1} parent=31 // pred_fallthru
          _
      $region32: #{tpu_custom_call.1} parent=5 // pred_fallthru
        _
      %p343 = scmp.le.s32.totalorder 2, %s16
      // Predicated region
      $region45: #{tpu_custom_call.1} parent=5 // pred_check
        %p344 = pneg %p343
      $region46: #{tpu_custom_call.1} parent=5 // pred_check_branch
        %346 = sbr.rel (%p344) target = $region48
      $region47: #{tpu_custom_call.1} parent=5 // pred_region
        %s347 = ssub.s32 %s16, 2
        // Predicated region
        $region49: #{tpu_custom_call.1} parent=47 // pred_check
          %p348 = pneg %p129
        $region50: #{tpu_custom_call.1} parent=47 // pred_check_branch
          %350 = sbr.rel (%p348) target = $region52
        $region51: #{tpu_custom_call.1} parent=47 // pred_region
          %s351 = sand.u32 %s114, 1
          %s352 = scalar_lea.sflag [#allocation4], %s351
          %s353 = sand.u32 %s114, 1
          %s354 = smul.addr %s353, 4
          %s355 = scalar_lea.vmem [#allocation7], %s354
          %357 = dma.done %s352, 64
        $region52: #{tpu_custom_call.1} parent=47 // pred_fallthru
          _
      $region48: #{tpu_custom_call.1} parent=5 // pred_fallthru
        _
    $region6: #{tpu_custom_call.1} parent=1 // loop_footer
      %s20 = sadd.s32 1, %s16
    $region7: #{tpu_custom_call.1} parent=1 // loop_footer_branch
      %15 = sbr.rel target = $region3
    $region8: #{tpu_custom_call.1} parent=1 // loop_exit
      _
    %358 = vsyncpa [#allocation3], 1
    %s359 = scalar_lea.sflag [#allocation3], 1
    %360 = vsyncpa %s359, 1
    %361 = vsyncpa [#allocation6], 1
    %362 = vsyncpa [#allocation4], 1
    %s363 = scalar_lea.sflag [#allocation4], 1
    %364 = vsyncpa %s363, 1

</llo_original>
